<compile_context>
chip_gen: v7x
topology: tpu7x:2x2x1
jax: 0.10.0
libtpu: 0.0.40
codegen_flags: <defaults>
</compile_context>

<pallas_src>
import functools

import jax
import jax.numpy as jnp
from jax import lax
from jax.experimental import pallas as pl
from jax.experimental.pallas import tpu as pltpu

_LANES = 128


def _bce_kernel(x_ref, t_ref, reg_ref, out_ref, acc_ref, *,
                rows, tile_rows, inv_divisor):
    # x_ref / t_ref: (tile_rows, 128) f32 VMEM blocks
    # reg_ref:       (1,) f32 SMEM (runtime reg_loss)
    # out_ref:       (1,) f32 SMEM scalar loss
    # acc_ref:       (tile_rows, 128) f32 VMEM persistent accumulator
    i = pl.program_id(0)

    @pl.when(i == 0)
    def _init():
        acc_ref[...] = jnp.zeros_like(acc_ref)

    x = x_ref[...]
    t = t_ref[...]

    # PyTorch's binary_cross_entropy clamps each log term at -100.
    log_x = jnp.maximum(jnp.log(x), -100.0)

    # Accurate log1p(-x) (matches PyTorch's log1p) from ops guaranteed to lower:
    #   log1p(y) = y                       if fl(1+y) == 1
    #            = log(u) * y / (u - 1)    otherwise, u = fl(1+y)
    y = -x
    u = 1.0 + y
    log_1mx = jnp.where(u == 1.0, y, jnp.log(u) * y / (u - 1.0))
    log_1mx = jnp.maximum(log_1mx, -100.0)

    elem = -(t * log_x + (1.0 - t) * log_1mx)

    if rows % tile_rows != 0:
        # Last grid block extends past the array: zero the garbage rows.
        # (int32 compare against a static row count -- exact for any size.)
        row = i * tile_rows + lax.broadcasted_iota(jnp.int32, elem.shape, 0)
        elem = jnp.where(row < rows, elem, 0.0)

    acc_ref[...] += elem   # steady state: pure VPU, no per-tile XLU reduce

    @pl.when(i == pl.num_programs(0) - 1)
    def _finalize():
        out_ref[0] = jnp.sum(acc_ref[...]) * inv_divisor + reg_ref[0]


@functools.partial(jax.jit, static_argnames=("reduction",))
def pfedme_bce_loss(logits, target, reg_loss, reduction="mean"):
    """Pallas implementation of pFedMe_BCELoss.forward (reduction: 'mean' or 'sum')."""
    assert reduction in ("mean", "sum")
    # TODO(synk): reduction='none' (elementwise output) not wired up.
    x = logits.astype(jnp.float32).reshape(-1)
    t = target.astype(jnp.float32).reshape(-1)
    n = x.size

    if n % _LANES != 0:
        # Rare path: pad only the sub-128 tail so the (rows, 128) view exists.
        # logits=1 / target=1 makes the padded BCE terms exactly zero.
        pad = _LANES - n % _LANES
        x = jnp.pad(x, (0, pad), constant_values=1.0)
        t = jnp.pad(t, (0, pad), constant_values=1.0)

    rows = x.size // _LANES
    tile_rows = min(512, -(-rows // 8) * 8)          # multiple of 8, <= 512
    grid = pl.cdiv(rows, tile_rows)
    inv_divisor = (1.0 / n) if reduction == "mean" else 1.0   # n static under jit

    x2 = x.reshape(rows, _LANES)
    t2 = t.reshape(rows, _LANES)
    reg = jnp.asarray(reg_loss, jnp.float32).reshape(1)

    kernel = functools.partial(
        _bce_kernel, rows=rows, tile_rows=tile_rows, inv_divisor=inv_divisor)

    out = pl.pallas_call(
        kernel,
        out_shape=jax.ShapeDtypeStruct((1,), jnp.float32),
        grid=(grid,),
        in_specs=[
            pl.BlockSpec((tile_rows, _LANES), lambda i: (i, 0)),
            pl.BlockSpec((tile_rows, _LANES), lambda i: (i, 0)),
            pl.BlockSpec(memory_space=pltpu.SMEM),
        ],
        out_specs=pl.BlockSpec(memory_space=pltpu.SMEM),
        scratch_shapes=[pltpu.VMEM((tile_rows, _LANES), jnp.float32)],
        compiler_params=pltpu.CompilerParams(
            dimension_semantics=("arbitrary",)),
        # TODO(synk): optional 2-way "parallel" megacore split for v7x (per-core
        # partial sums combined in the wrapper) not implemented.
    )(x2, t2, reg)
    return out[0]


def _reference(logits, target, reg_loss, reduction="mean"):
    x = logits.astype(jnp.float32)
    t = target.astype(jnp.float32)
    elem = -(t * jnp.maximum(jnp.log(x), -100.0)
             + (1.0 - t) * jnp.maximum(jnp.log1p(-x), -100.0))
    red = jnp.mean(elem) if reduction == "mean" else jnp.sum(elem)
    return red + jnp.asarray(reg_loss, jnp.float32)


if __name__ == "__main__":
    key = jax.random.PRNGKey(0)
    k1, k2, k3 = jax.random.split(key, 3)

    # Small shapes consistent with the module's usage (probabilities + binary targets).
    B, C, H, W = 2, 4, 16, 16
    logits = jax.nn.sigmoid(jax.random.normal(k1, (B, C, H, W), jnp.float32))
    target = jax.random.bernoulli(k2, 0.5, (B, C, H, W)).astype(jnp.float32)
    reg_loss = jax.random.uniform(k3, (), jnp.float32)  # scalar regularization term

    out = jax.block_until_ready(pfedme_bce_loss(logits, target, reg_loss, reduction="mean"))
    ref = _reference(logits, target, reg_loss, reduction="mean")
    assert jnp.allclose(out, ref, rtol=1e-5, atol=1e-5), (out, ref)

    out_s = jax.block_until_ready(pfedme_bce_loss(logits, target, reg_loss, reduction="sum"))
    ref_s = _reference(logits, target, reg_loss, reduction="sum")
    assert jnp.allclose(out_s, ref_s, rtol=1e-5, atol=1e-3), (out_s, ref_s)

    # Ragged shape: exercises the tail-pad fallback and the in-kernel row mask.
    lr = jax.nn.sigmoid(jax.random.normal(k1, (3, 5, 7, 11), jnp.float32))
    tr = jax.random.bernoulli(k2, 0.5, (3, 5, 7, 11)).astype(jnp.float32)
    out_r = jax.block_until_ready(pfedme_bce_loss(lr, tr, reg_loss, reduction="mean"))
    ref_r = _reference(lr, tr, reg_loss, reduction="mean")
    assert jnp.allclose(out_r, ref_r, rtol=1e-5, atol=1e-5), (out_r, ref_r)

    print("KERNEL_OK")
</pallas_src>

<mosaic_0001>
module attributes {stable_mosaic.version = 11 : i64} {
  func.func @_bce_kernel(%arg0: i32, %arg1: memref<16x128xf32, #tpu.memory_space<vmem>>, %arg2: memref<16x128xf32, #tpu.memory_space<vmem>>, %arg3: memref<1xf32, #tpu.memory_space<smem>>, %arg4: memref<1xf32, #tpu.memory_space<smem>>, %arg5: memref<16x128xf32, #tpu.memory_space<vmem>>) attributes {dimension_semantics = [#tpu.dimension_semantics<arbitrary>], iteration_bounds = array<i64: 1>, scalar_prefetch = 0 : i64, scratch_operands = 1 : i64, tpu.core_type = #tpu.core_type<tc>, window_params = [{transform_indices = @transform_0, window_bounds = array<i64: 16, 128>}, {transform_indices = @transform_1, window_bounds = array<i64: 16, 128>}, {transform_indices = @transform_2, window_bounds = array<i64: 1>}, {transform_indices = @transform_3, window_bounds = array<i64: 1>}]} {
    %c0_i32 = arith.constant 0 : i32
    %0 = arith.cmpi eq, %arg0, %c0_i32 : i32
    %1 = arith.extui %0 : i1 to i32
    %c0_i32_0 = arith.constant 0 : i32
    %2 = arith.cmpi ne, %1, %c0_i32_0 : i32
    scf.if %2 {
      %cst_17 = arith.constant 0.000000e+00 : f32
      %35 = vector.broadcast %cst_17 : f32 to vector<16x128xf32>
      %c0_18 = arith.constant 0 : index
      %c0_19 = arith.constant 0 : index
      %36 = vector.load %arg5[%c0_18, %c0_19] : memref<16x128xf32, #tpu.memory_space<vmem>>, vector<16x128xf32>
      tpu.vector_store %arg5[%c0_18, %c0_19], %35 {strides = array<i32>} : memref<16x128xf32, #tpu.memory_space<vmem>>, vector<16x128xf32>,
    } else {
    }
    %c0 = arith.constant 0 : index
    %c0_1 = arith.constant 0 : index
    %3 = vector.load %arg1[%c0, %c0_1] : memref<16x128xf32, #tpu.memory_space<vmem>>, vector<16x128xf32>
    %c0_2 = arith.constant 0 : index
    %c0_3 = arith.constant 0 : index
    %4 = vector.load %arg2[%c0_2, %c0_3] : memref<16x128xf32, #tpu.memory_space<vmem>>, vector<16x128xf32>
    %5 = math.log %3 : vector<16x128xf32>
    %cst = arith.constant -1.000000e+02 : f32
    %6 = vector.broadcast %cst : f32 to vector<16x128xf32>
    %7 = arith.maximumf %5, %6 : vector<16x128xf32>
    %cst_4 = arith.constant 0.000000e+00 : f32
    %8 = vector.broadcast %cst_4 : f32 to vector<16x128xf32>
    %9 = arith.subf %8, %3 : vector<16x128xf32>
    %cst_5 = arith.constant 1.000000e+00 : f32
    %10 = vector.broadcast %cst_5 : f32 to vector<16x128xf32>
    %11 = arith.addf %10, %9 : vector<16x128xf32>
    %cst_6 = arith.constant 1.000000e+00 : f32
    %12 = vector.broadcast %cst_6 : f32 to vector<16x128xf32>
    %13 = arith.cmpf oeq, %11, %12 : vector<16x128xf32>
    %14 = math.log %11 : vector<16x128xf32>
    %15 = arith.mulf %14, %9 : vector<16x128xf32>
    %cst_7 = arith.constant 1.000000e+00 : f32
    %16 = vector.broadcast %cst_7 : f32 to vector<16x128xf32>
    %17 = arith.subf %11, %16 : vector<16x128xf32>
    %18 = arith.divf %15, %17 : vector<16x128xf32>
    %19 = arith.select %13, %9, %18 : vector<16x128xi1>, vector<16x128xf32>
    %cst_8 = arith.constant -1.000000e+02 : f32
    %20 = vector.broadcast %cst_8 : f32 to vector<16x128xf32>
    %21 = arith.maximumf %19, %20 : vector<16x128xf32>
    %22 = arith.mulf %4, %7 : vector<16x128xf32>
    %cst_9 = arith.constant 1.000000e+00 : f32
    %23 = vector.broadcast %cst_9 : f32 to vector<16x128xf32>
    %24 = arith.subf %23, %4 : vector<16x128xf32>
    %25 = arith.mulf %24, %21 : vector<16x128xf32>
    %26 = arith.addf %22, %25 : vector<16x128xf32>
    %cst_10 = arith.constant 0.000000e+00 : f32
    %27 = vector.broadcast %cst_10 : f32 to vector<16x128xf32>
    %28 = arith.subf %27, %26 : vector<16x128xf32>
    %c0_11 = arith.constant 0 : index
    %c0_12 = arith.constant 0 : index
    %29 = vector.load %arg5[%c0_11, %c0_12] : memref<16x128xf32, #tpu.memory_space<vmem>>, vector<16x128xf32>
    %30 = arith.addf %29, %28 : vector<16x128xf32>
    %c0_13 = arith.constant 0 : index
    %c0_14 = arith.constant 0 : index
    %31 = vector.load %arg5[%c0_13, %c0_14] : memref<16x128xf32, #tpu.memory_space<vmem>>, vector<16x128xf32>
    tpu.vector_store %arg5[%c0_13, %c0_14], %30 {strides = array<i32>} : memref<16x128xf32, #tpu.memory_space<vmem>>, vector<16x128xf32>,
    %c0_i32_15 = arith.constant 0 : i32
    %32 = arith.cmpi eq, %arg0, %c0_i32_15 : i32
    %33 = arith.extui %32 : i1 to i32
    %c0_i32_16 = arith.constant 0 : i32
    %34 = arith.cmpi ne, %33, %c0_i32_16 : i32
    scf.if %34 {
      %c0_17 = arith.constant 0 : index
      %c0_18 = arith.constant 0 : index
      %35 = vector.load %arg5[%c0_17, %c0_18] : memref<16x128xf32, #tpu.memory_space<vmem>>, vector<16x128xf32>
      %36 = vector.shape_cast %35 : vector<16x128xf32> to vector<1x16x128xf32>
      %cst_19 = arith.constant dense<0.000000e+00> : vector<1xf32>
      %37 = vector.multi_reduction <add>, %36, %cst_19 [1, 2] : vector<1x16x128xf32> to vector<1xf32>
      %38 = vector.shape_cast %37 : vector<1xf32> to vector<1x1x1xf32>
      %39 = vector.extract %38[0, 0, 0] : f32 from vector<1x1x1xf32>
      %cst_20 = arith.constant 4.8828125E-4 : f32
      %40 = arith.mulf %39, %cst_20 : f32
      %c0_21 = arith.constant 0 : index
      %41 = memref.load %arg3[%c0_21] : memref<1xf32, #tpu.memory_space<smem>>
      %42 = arith.addf %40, %41 : f32
      %c0_22 = arith.constant 0 : index
      %43 = memref.load %arg4[%c0_22] : memref<1xf32, #tpu.memory_space<smem>>
      memref.store %42, %arg4[%c0_22] : memref<1xf32, #tpu.memory_space<smem>>
    } else {
    }
    return
  }
  func.func @transform_0(%arg0: i32) -> (i32, i32) {
    %c0_i32 = arith.constant 0 : i32
    %c0_i32_0 = arith.constant 0 : i32
    return %arg0, %c0_i32 : i32, i32
  }
  func.func @transform_1(%arg0: i32) -> (i32, i32) {
    %c0_i32 = arith.constant 0 : i32
    %c0_i32_0 = arith.constant 0 : i32
    return %arg0, %c0_i32 : i32, i32
  }
  func.func @transform_2(%arg0: i32) -> i32 {
    %c0_i32 = arith.constant 0 : i32
    %c0_i32_0 = arith.constant 0 : i32
    return %c0_i32 : i32
  }
  func.func @transform_3(%arg0: i32) -> i32 {
    %c0_i32 = arith.constant 0 : i32
    %c0_i32_0 = arith.constant 0 : i32
    return %c0_i32 : i32
  }
}

</mosaic_0001>

<llo_original>
// kernel: pfedme_bce_loss.1
$region0: #{pfedme_bce_loss.1}
  #allocation0 [shape = 'u32[]', space=smem, size = 0x4, offset = 0x4, fixed_abs, tag = 'smem constant byte address 0x4 - core index']
  #allocation1 [shape = 'u32[144,128]{1,0:T(1,128)}', space=vmem, size = 0x12000, scoped, tag = 'internal scratch']
  #allocation2 [shape = 'f32[16,128]{1,0:T(8,128)}', space=vmem, size = 0x2000, scoped, tag = 'scratch operand']
  #allocation3 [shape = 'f32[1]{0:T(128)S(6)}', space=smem, size = 0x200, scoped, tag = 'scoped memory for pfedme_bce_loss.1']
  %s0 = inlined_call_operand.vmem [shape: f32[16,128], index: 0, kind: input, shape index: {}]
  %s1 = inlined_call_operand.vmem [shape: f32[16,128], index: 1, kind: input, shape index: {}]
  %s2 = inlined_call_operand.<no memory space> [shape: f32[1], index: 2, kind: input, shape index: {}]
  %s3 = inlined_call_operand.hbm [shape: f32[1], index: 3, kind: output, shape index: {}]
  %s4 = sld [smem:[#allocation0]]
  $region30: #{pfedme_bce_loss.1} parent=0
    _
  %s6 = ssub.s32 1, %s4
  %s7 = scalar_select 0, %s6, %s4
  %8 = sst [smem:[#allocation3]] %s2
  $region1: #{pfedme_bce_loss.1} parent=0
    #allocation4 [shape = 'u8[512]{0}', space=smem, size = 0x200, scoped, tag = 'output window, operand 0, single buffered']
    #allocation5 [shape = 's32[1]{0}', space=sflag, size = 0x4, scoped, tag = 'scoped memory for pfedme_bce_loss.1']
    %9 = vsyncpa [#allocation5], 0
    // Predicated region
    $region2: #{pfedme_bce_loss.1} parent=1 // pred_check
      _
    $region3: #{pfedme_bce_loss.1} parent=1 // pred_check_branch
      %11 = sbr.rel (0) target = $region5
    $region4: #{pfedme_bce_loss.1} parent=1 // pred_region
      _
    $region5: #{pfedme_bce_loss.1} parent=1 // pred_fallthru
      _
    // Predicated region
    $region6: #{pfedme_bce_loss.1} parent=1 // pred_check
      _
    $region7: #{pfedme_bce_loss.1} parent=1 // pred_check_branch
      %13 = sbr.rel (0) target = $region9
    $region8: #{pfedme_bce_loss.1} parent=1 // pred_region
      _
    $region9: #{pfedme_bce_loss.1} parent=1 // pred_fallthru
      _
    // Predicated region
    $region10: #{pfedme_bce_loss.1} parent=1 // pred_check
      _
    $region11: #{pfedme_bce_loss.1} parent=1 // pred_check_branch
      %15 = sbr.rel (0) target = $region13
    $region12: #{pfedme_bce_loss.1} parent=1 // pred_region
      _
    $region13: #{pfedme_bce_loss.1} parent=1 // pred_fallthru
      _
    %p16 = scmp.eq.s32.totalorder 0, 0
    // Predicated region
    $region14: #{pfedme_bce_loss.1} parent=1 // pred_check
      %p17 = pneg %p16
    $region15: #{pfedme_bce_loss.1} parent=1 // pred_check_branch
      %19 = sbr.rel (%p17) target = $region17
    $region16: #{pfedme_bce_loss.1} parent=1 // pred_region
      %20 = vst [vmem:[#allocation2] sm:$0xff] 0.0
      %21 = vst [vmem:[#allocation2 + $0x8] sm:$0xff] 0.0
    $region17: #{pfedme_bce_loss.1} parent=1 // pred_fallthru
      _
    %v22 = vld [vmem:[%s0] sm:$0xff]
    %v23 = vld [vmem:[%s0 + $0x8] sm:$0xff]
    %v24 = vld [vmem:[%s1] sm:$0xff]
    %v25 = vld [vmem:[%s1 + $0x8] sm:$0xff]
    %v26 = vlog2.pop %v22
    %v27 = vmul.f32 %v26, 0.6931472
    %v28 = vlog2.pop %v23
    %v29 = vmul.f32 %v28, 0.6931472
    %v30 = vmax.f32 %v27, -100.0
    %v31 = vmax.f32 %v29, -100.0
    %v32 = vsub.f32 0.0, %v22
    %v33 = vsub.f32 0.0, %v23
    %v34 = vadd.f32 %v32, 1.0
    %v35 = vadd.f32 %v33, 1.0
    %vm36 = vcmp.eq.f32.partialorder %v34, 1.0
    %vm37 = vcmp.eq.f32.partialorder %v35, 1.0
    %v38 = vlog2.pop %v34
    %v39 = vmul.f32 %v38, 0.6931472
    %v40 = vlog2.pop %v35
    %v41 = vmul.f32 %v40, 0.6931472
    %v42 = vmul.f32 %v39, %v32
    %v43 = vmul.f32 %v41, %v33
    %v44 = vsub.f32 %v34, 1.0
    %v45 = vsub.f32 %v35, 1.0
    %v46 = vrcp.pop %v44
    %v47 = vmul.f32 %v42, %v46
    %v48 = vrcp.pop %v45
    %v49 = vmul.f32 %v43, %v48
    %v50 = vsel %vm36, %v32, %v47
    %v51 = vsel %vm37, %v33, %v49
    %v52 = vmax.f32 %v50, -100.0
    %v53 = vmax.f32 %v51, -100.0
    %v54 = vmul.f32 %v24, %v30
    %v55 = vmul.f32 %v25, %v31
    %v56 = vsub.f32 1.0, %v24
    %v57 = vsub.f32 1.0, %v25
    %v58 = vmul.f32 %v56, %v52
    %v59 = vmul.f32 %v57, %v53
    %v60 = vadd.f32 %v54, %v58
    %v61 = vadd.f32 %v55, %v59
    %v62 = vsub.f32 0.0, %v60
    %v63 = vsub.f32 0.0, %v61
    %v64 = vld [vmem:[#allocation2] sm:$0xff]
    %v65 = vld [vmem:[#allocation2 + $0x8] sm:$0xff]
    %v66 = vadd.f32 %v64, %v62
    %v67 = vadd.f32 %v65, %v63
    %68 = vst [vmem:[#allocation2] sm:$0xff] %v66
    %69 = vst [vmem:[#allocation2 + $0x8] sm:$0xff] %v67
    // Predicated region
    $region18: #{pfedme_bce_loss.1} parent=1 // pred_check
      %p70 = pneg %p16
    $region19: #{pfedme_bce_loss.1} parent=1 // pred_check_branch
      %72 = sbr.rel (%p70) target = $region21
    $region20: #{pfedme_bce_loss.1} parent=1 // pred_region
      %v73 = vld [vmem:[#allocation2] sm:$0xff]
      %v74 = vld [vmem:[#allocation2 + $0x8] sm:$0xff]
      %v75 = vadd.f32 %v73, %v74
      %76 = vadd.xlane.f32.xlu0 %v75
      %v77 = vpop.xlane.xlu0 %76
      %v78 = vrot.slane %v77, 4
      %v79 = vadd.f32 %v77, %v78
      %v80 = vrot.slane %v79, 2
      %v81 = vadd.f32 %v79, %v80
      %v82 = vrot.slane %v81, 1
      %v83 = vadd.f32 %v81, %v82
      %s84 = vtos %v83
      %s85 = smul.f32 %s84, 0.00048828125
      %s86 = sld [smem:[#allocation3]]
      %s87 = sadd.f32 %s85, %s86
      %s88 = scalar_lea.smem [#allocation4], 0
      %89 = sst [smem:[%s88]] %s87
    $region21: #{pfedme_bce_loss.1} parent=1 // pred_fallthru
      _
    // Predicated region
    $region22: #{pfedme_bce_loss.1} parent=1 // pred_check
      _
    $region23: #{pfedme_bce_loss.1} parent=1 // pred_check_branch
      %91 = sbr.rel (0) target = $region25
    $region24: #{pfedme_bce_loss.1} parent=1 // pred_region
      %s93 = ssub.s32 16, 16
      %94 = vsyncadd [#allocation5], %s93
      %97 = dma.smem_to_hbm [#allocation4], 16, %s3, [#allocation5]
    $region25: #{pfedme_bce_loss.1} parent=1 // pred_fallthru
      _
    // Predicated region
    $region26: #{pfedme_bce_loss.1} parent=1 // pred_check
      _
    $region27: #{pfedme_bce_loss.1} parent=1 // pred_check_branch
      %99 = sbr.rel (0) target = $region29
    $region28: #{pfedme_bce_loss.1} parent=1 // pred_region
      %100 = dma.done [#allocation5], 16
    $region29: #{pfedme_bce_loss.1} parent=1 // pred_fallthru
      _
    %101 = sfence
    %102 = vsyncpa [#allocation5], 1

</llo_original>
